<compile_context>
chip_gen: v7x
topology: tpu7x:2x2x1
jax: 0.10.0
libtpu: 0.0.40
codegen_flags: <defaults>
</compile_context>

<pallas_src>
import numpy as np
import jax
import jax.numpy as jnp
from jax import lax
from jax.experimental import pallas as pl
from jax.experimental.pallas import tpu as pltpu


# ---------------------------------------------------------------------------
# Deterministic parameter construction (numpy) -- mirrors CQTsmall.__init__
# ---------------------------------------------------------------------------

def _blackmanharris(M):
    """Symmetric 4-term Blackman-Harris window (scipy get_window, fftbins=False)."""
    if M == 1:
        return np.ones(1)
    a = (0.35875, 0.48829, 0.14128, 0.01168)
    n = np.arange(M)
    theta = 2.0 * np.pi * n / (M - 1)
    return (a[0] - a[1] * np.cos(theta) + a[2] * np.cos(2 * theta)
            - a[3] * np.cos(3 * theta))


def create_cqt_kernel(Q, fs, fmin, n_bins, bins_per_octave=12):
    n_bins = int(n_bins)
    bins_per_octave = int(bins_per_octave)
    freqs = fmin * 2.0 ** (np.arange(n_bins) / np.double(bins_per_octave))
    lengths = np.ceil(Q * fs / freqs)
    max_len = int(lengths[0])
    if max_len % 2 == 0:
        max_len += 1
    temp = np.zeros((n_bins, max_len), dtype=np.complex64)
    for k in range(n_bins):
        l = int(lengths[k])
        start = (max_len - l) // 2
        window = _blackmanharris(l)
        phase = np.exp(1j * 2 * np.pi * np.arange(-l // 2 + 1, l // 2 + 1)
                       * freqs[k] / fs)
        temp[k, start:start + l] = window / np.sum(window) * phase
    return temp, max_len


def butter_lowpass(order, wn):
    """Digital Butterworth lowpass.  Returns (b, a) (same math as
    scipy.signal.iirfilter(order, wn, btype='low', ftype='butter', output='ba'))
    plus a second-order-sections factorisation used for the actual filtering."""
    assert order % 2 == 0
    fs = 2.0
    warped = 2.0 * fs * np.tan(np.pi * wn / fs)
    k = np.arange(1, order + 1)
    p = warped * np.exp(1j * np.pi * (2 * k + order - 1) / (2 * order))  # analog, LHP
    fs2 = 2.0 * fs                                                       # bilinear
    p_z = (fs2 + p) / (fs2 - p)
    gain_z = (warped ** order) * np.real(1.0 / np.prod(fs2 - p))
    b_full = np.real(gain_z * np.poly(-np.ones(order)))
    a_full = np.real(np.poly(p_z))

    # Second-order sections: poles come in conjugate pairs; p_z[:order//2] are
    # the upper-half-plane members.  Zeros are all at z = -1; gain is spread
    # evenly across sections for f32 robustness.
    nsec = order // 2
    g_sec = float(gain_z) ** (1.0 / nsec)
    sos = np.zeros((nsec, 6))
    for i, pz in enumerate(p_z[:nsec]):
        sos[i] = [g_sec, 2.0 * g_sec, g_sec, 1.0, -2.0 * np.real(pz), np.abs(pz) ** 2]

    # Sanity: product of sections reproduces (b, a).
    bc, ac = np.ones(1), np.ones(1)
    for s in sos:
        bc = np.convolve(bc, s[:3])
        ac = np.convolve(ac, s[3:])
    assert np.allclose(bc, b_full, rtol=1e-4, atol=1e-7)
    assert np.allclose(ac, a_full, rtol=1e-4, atol=1e-7)
    return b_full, a_full, sos


def _biquad_block_consts(sec, P=128):
    """Precompute (in float64) the block-scan constants for one biquad applied
    in transposed direct-form II with zero initial state:
        s_{n+1} = A s_n + Bv x_n ,  y_n = b0 x_n + s_n[0] ,  s_0 = 0
    Returns (b0, A^t for t=0..P, Tmat[t,s] = A^{t-1-s} Bv masked to s<t)."""
    b = np.asarray(sec[:3], np.float64)
    a = np.asarray(sec[3:], np.float64)
    b = b / a[0]
    a = a / a[0]
    A = np.array([[-a[1], 1.0], [-a[2], 0.0]])
    Bv = np.array([b[1] - a[1] * b[0], b[2] - a[2] * b[0]])
    Apow = np.zeros((P + 1, 2, 2))
    Apow[0] = np.eye(2)
    for t in range(1, P + 1):
        Apow[t] = A @ Apow[t - 1]
    V = Apow @ Bv                                              # (P+1, 2)
    d = np.arange(P + 1)[:, None] - 1 - np.arange(P)[None, :]
    Tmat = np.where((d >= 0)[..., None], V[np.clip(d, 0, P)], 0.0)  # (P+1, P, 2)
    return float(b[0]), jnp.asarray(Apow, jnp.float32), jnp.asarray(Tmat, jnp.float32)


class CQTsmallParams:
    """Holds the same parameters CQTsmall.__init__ creates (as jnp arrays)."""

    def __init__(self, fs, fmin, octaves, bins_per_octave, hop, filter_scale=1,
                 iir_block=128):
        self.fs = fs
        self.fmin = fmin
        self.bins_per_octave = int(bins_per_octave)
        self.octaves = int(octaves)
        self.n_bins = int(octaves * bins_per_octave)
        freq_mul = 2 ** (octaves - 1)
        self.hop = int(max(1, round(hop / freq_mul)) * freq_mul)
        fmin_max = fmin * freq_mul
        Q = float(filter_scale) / (2 ** (1.0 / bins_per_octave) - 1)
        kern, self.width = create_cqt_kernel(Q, fs, fmin_max,
                                             bins_per_octave, bins_per_octave)
        # (2 * bins_per_octave, width): real parts stacked over imaginary parts
        self.cqt_kernels = jnp.asarray(
            np.concatenate([np.real(kern), np.imag(kern)], axis=0)
            .astype(np.float32))
        b, a, sos = butter_lowpass(10, 0.48)
        self.iir_num = jnp.asarray(b.astype(np.float32))   # kept for module parity
        self.iir_den = jnp.asarray(a.astype(np.float32))
        # Block-scan constants per second-order section (numerically robust f32).
        self.filt_sections = tuple(_biquad_block_consts(s, P=iir_block) for s in sos)


# ---------------------------------------------------------------------------
# Pallas kernel: conv1d(stride=hop) as a tiled, lane-dense MXU matmul with a
# fused (>=128-deep) im2col contraction assembled in VMEM.
# ---------------------------------------------------------------------------

def _round_up(x, m):
    return (x + m - 1) // m * m


def _cdiv(a, b):
    return (a + b - 1) // b


def cqt_octave(x, kernels, hop, pad):
    """torch conv1d(x[:,None,:], kernels[:,None,:], stride=hop, padding=pad)
    -> (B, C, T).  x: (B, L) f32, kernels: (C, W) f32."""
    B, L = x.shape
    C, W = kernels.shape
    T = (L + 2 * pad - W) // hop + 1

    # Fused contraction depth: enough hop-chunks to cover the W taps, padded so
    # the patch's minor dim is a multiple of 128 whenever hop divides 128.
    J = _cdiv(W, hop)
    J_pad = _cdiv(_round_up(J * hop, 128), hop)
    Kdepth = J_pad * hop

    TILE_T = min(2048, _round_up(T, 128))   # lane-dense output tile
    nT = _cdiv(T, TILE_T)
    Tp = nT * TILE_T
    win_ch = TILE_T + J_pad                 # chunks per tile (incl. halo)
    CH = min(256, TILE_T)                   # per-matmul output-column chunk

    # Zero pad (conv padding + right pad to whole chunks / whole tiles); cast
    # to bf16 only at the kernel boundary.
    total = max((Tp + J_pad) * hop, _round_up(pad + L, hop))
    x_pad = jnp.pad(x.astype(jnp.bfloat16), ((0, 0), (pad, total - pad - L)))
    x_chunks = x_pad.reshape(B, total // hop, hop)
    # Halo-duplicated tiles (B, nT, win_ch, hop): only J_pad extra chunks per
    # TILE_T, and it lets Pallas auto double-buffer the window DMA.
    idx = jnp.arange(nT)[:, None] * TILE_T + jnp.arange(win_ch)[None, :]
    x_tiles = x_chunks[:, idx, :]

    # Kernel bank flattened to (C, Kdepth); taps >= W are zero, so the extra
    # window samples pulled in by the padded contraction contribute nothing.
    k_flat = jnp.pad(kernels, ((0, 0), (0, Kdepth - W))).astype(jnp.bfloat16)

    dn = (((1,), (1,)), ((), ()))           # contract the tap axis of both operands

    def conv_kernel(x_ref, k_ref, o_ref):
        k_all = k_ref[...]                  # (C, Kdepth) bf16, resident
        for c0 in range(0, TILE_T, CH):     # static unroll; bounded live ranges
            # (CH, Kdepth) im2col patch: row t <- window chunks [c0+t, c0+t+J_pad)
            patch = jnp.concatenate(
                [x_ref[0, 0, pl.ds(c0 + j, CH), :] for j in range(J_pad)],
                axis=1)
            acc = lax.dot_general(k_all, patch, dn,
                                  preferred_element_type=jnp.float32)  # (C, CH)
            o_ref[0, :, pl.ds(c0, CH)] = acc.astype(o_ref.dtype)       # lane-dense

    # Put the larger parallel extent first (balanced 2-TC sharding on v7x).
    if nT >= B:
        grid = (nT, B)
        xmap = lambda i, b: (b, i, 0, 0)
        kmap = lambda i, b: (0, 0)
        omap = lambda i, b: (b, 0, i)
    else:
        grid = (B, nT)
        xmap = lambda b, i: (b, i, 0, 0)
        kmap = lambda b, i: (0, 0)
        omap = lambda b, i: (b, 0, i)

    out = pl.pallas_call(
        conv_kernel,
        out_shape=jax.ShapeDtypeStruct((B, C, Tp), jnp.float32),
        grid_spec=pltpu.PrefetchScalarGridSpec(
            num_scalar_prefetch=0,
            grid=grid,
            in_specs=[pl.BlockSpec((1, 1, win_ch, hop), xmap),
                      pl.BlockSpec((C, Kdepth), kmap)],
            out_specs=pl.BlockSpec((1, C, TILE_T), omap)),
        compiler_params=pltpu.CompilerParams(
            dimension_semantics=("parallel", "parallel")),
    )(x_tiles, k_flat)
    return out[:, :, :T]


# ---------------------------------------------------------------------------
# Anti-aliasing filtfilt: cascade of 5 biquads, each a block-parallel scan
# with precomputed A^k powers (only a 2-vector is carried across blocks).
# ---------------------------------------------------------------------------

def _biquad_block_lfilter(x, consts):
    """Zero-state y = lfilter(b, a, x) for one biquad along the last axis."""
    b0, Apow, Tmat = consts                  # (P+1,2,2), (P+1,P,2) constants
    Bn, L = x.shape
    P = Tmat.shape[1]
    nblk = _cdiv(L, P)
    Lp = nblk * P
    xb = jnp.pad(x, ((0, 0), (0, Lp - L))).reshape(Bn, nblk, P)
    # Intra-block zero-state contributions c[t] = sum_{s<t} A^{t-1-s} Bv x[s].
    c = jnp.einsum('tsi,bks->bkti', Tmat, xb,
                   precision=lax.Precision.HIGHEST)           # (Bn, nblk, P+1, 2)
    # Cross-block carry (nblk short sequential steps): s_{k+1} = A^P s_k + c_k[P]
    AP = Apow[P]
    cP = jnp.transpose(c[:, :, P, :], (1, 0, 2))              # (nblk, Bn, 2)

    def step(s, ck):
        return s @ AP.T + ck, s

    _, s0 = lax.scan(step, jnp.zeros((Bn, 2), x.dtype), cP)
    s0 = jnp.transpose(s0, (1, 0, 2))                         # (Bn, nblk, 2)
    st = jnp.einsum('tij,bkj->bkti', Apow[:P], s0,
                    precision=lax.Precision.HIGHEST) + c[:, :, :P, :]
    y = b0 * xb + st[..., 0]
    return y.reshape(Bn, Lp)[:, :L]


def _filtfilt_sos(x, sections):
    # TODO(synk): matches torchaudio.functional.filtfilt (zero initial state,
    # forward then backward); scipy's filtfilt additionally does odd-extension
    # padding and steady-state initial conditions.
    y = x
    for consts in sections:
        y = _biquad_block_lfilter(y, consts)
    y = y[:, ::-1]
    for consts in sections:
        y = _biquad_block_lfilter(y, consts)
    return y[:, ::-1]


def down2sample(x, sections):
    return _filtfilt_sos(x, sections)[:, ::2]


# ---------------------------------------------------------------------------
# Forward pass (mirrors CQTsmall.forward)
# ---------------------------------------------------------------------------

def audio_input(x):
    if x.ndim == 2:
        x = x[:, None, :]
    elif x.ndim == 1:
        x = x[None, None, :]
    elif x.ndim == 3:
        pass
    else:
        raise ValueError("Only support input with shape = (batch, len) or (len)")
    if x.shape[1] > 1:
        x = jnp.mean(x, axis=1, keepdims=True)
    return x


def cqt_forward(params, x, conv_fn=cqt_octave):
    x = audio_input(x)[:, 0, :]                               # (B, L) float32
    pad = params.width // 2
    hop = params.hop
    bpo = params.bins_per_octave
    B = x.shape[0]

    first = conv_fn(x, params.cqt_kernels, hop, pad)          # (B, 2*bpo, T)
    results = [first.reshape(B, 2, bpo, -1)]
    for _ in range(1, params.octaves):
        hop //= 2
        x = down2sample(x, params.filt_sections)              # stays float32
        res = conv_fn(x, params.cqt_kernels, hop, pad)
        results.insert(0, res.reshape(B, 2, bpo, -1))
    t_min = min(r.shape[-1] for r in results)                 # equal by module design
    results = [r[..., :t_min] for r in results]
    return jnp.concatenate(results, axis=2)                   # (B, 2, n_bins, T)


# ---------------------------------------------------------------------------
# Pure-JAX f32 reference for the conv hot path (used only for validation)
# ---------------------------------------------------------------------------

def _conv1d_ref(x, kernels, hop, pad):
    B, L = x.shape
    C, W = kernels.shape
    x_pad = jnp.pad(x, ((0, 0), (pad, pad)))
    T = (L + 2 * pad - W) // hop + 1
    idx = jnp.arange(T)[:, None] * hop + jnp.arange(W)[None, :]
    patches = x_pad[:, idx]                                   # (B, T, W)
    return jnp.einsum('btw,cw->bct', patches, kernels,
                      precision=lax.Precision.HIGHEST)


# ---------------------------------------------------------------------------
# Demo
# ---------------------------------------------------------------------------

if __name__ == "__main__":
    params = CQTsmallParams(fs=4000, fmin=500.0, octaves=2,
                            bins_per_octave=12, hop=64)

    key = jax.random.PRNGKey(0)
    x = jax.random.normal(key, (2, 2048), dtype=jnp.float32)  # (batch, len)

    fwd = jax.jit(lambda xx: cqt_forward(params, xx))
    out = jax.block_until_ready(fwd(x))

    # Expected: (B, 2, octaves * bins_per_octave, T)
    assert out.ndim == 4
    assert out.shape[0] == 2 and out.shape[1] == 2
    assert out.shape[2] == params.n_bins
    assert out.dtype == jnp.float32

    # Validate the Pallas (bf16-in / f32-accumulate) conv against an f32 ref.
    ref_fwd = jax.jit(lambda xx: cqt_forward(params, xx, conv_fn=_conv1d_ref))
    ref = jax.block_until_ready(ref_fwd(x))
    assert ref.shape == out.shape
    rel_err = float(jnp.max(jnp.abs(out - ref)) / (jnp.max(jnp.abs(ref)) + 1e-8))
    assert rel_err < 5e-2, f"mismatch vs f32 reference: rel-max-err={rel_err}"

    print("KERNEL_OK")
</pallas_src>

<mosaic_0001>
module attributes {stable_mosaic.version = 11 : i64} {
  func.func @conv_kernel(%arg0: i32, %arg1: i32, %arg2: memref<1x1x130x64xbf16, #tpu.memory_space<vmem>>, %arg3: memref<24x128xbf16, #tpu.memory_space<vmem>>, %arg4: memref<1x24x128xf32, #tpu.memory_space<vmem>>) attributes {dimension_semantics = [#tpu.dimension_semantics<parallel>, #tpu.dimension_semantics<parallel>], iteration_bounds = array<i64: 2, 1>, scalar_prefetch = 0 : i64, scratch_operands = 0 : i64, tpu.core_type = #tpu.core_type<tc>, window_params = [{transform_indices = @transform_0, window_bounds = array<i64: 1, 1, 130, 64>}, {pipeline_mode = #tpu.pipeline_mode<synchronous>, transform_indices = @transform_1, window_bounds = array<i64: 24, 128>}, {transform_indices = @transform_2, window_bounds = array<i64: 1, 24, 128>}]} {
    %c0 = arith.constant 0 : index
    %c0_0 = arith.constant 0 : index
    %0 = vector.load %arg3[%c0, %c0_0] : memref<24x128xbf16, #tpu.memory_space<vmem>>, vector<24x128xbf16>
    %c0_1 = arith.constant 0 : index
    %c0_2 = arith.constant 0 : index
    %c0_3 = arith.constant 0 : index
    %c0_4 = arith.constant 0 : index
    %1 = vector.load %arg2[%c0_1, %c0_2, %c0_3, %c0_4] : memref<1x1x130x64xbf16, #tpu.memory_space<vmem>>, vector<1x1x128x64xbf16>
    %2 = vector.shape_cast %1 : vector<1x1x128x64xbf16> to vector<128x64xbf16>
    %c0_5 = arith.constant 0 : index
    %c0_6 = arith.constant 0 : index
    %c1 = arith.constant 1 : index
    %c0_7 = arith.constant 0 : index
    %3 = vector.load %arg2[%c0_5, %c0_6, %c1, %c0_7] : memref<1x1x130x64xbf16, #tpu.memory_space<vmem>>, vector<1x1x128x64xbf16>
    %4 = vector.shape_cast %3 : vector<1x1x128x64xbf16> to vector<128x64xbf16>
    %5 = tpu.concatenate %2, %4 in 1 : vector<128x64xbf16>, vector<128x64xbf16> -> vector<128x128xbf16>
    %cst = arith.constant dense<0.000000e+00> : vector<24x128xf32>
    %6 = tpu.matmul %0, %5, %cst {dimension_numbers = #tpu.dot_dimension_numbers<[1], [1], [0], [0], [0, 0, 1, 0], [], []>} : vector<24x128xbf16>, vector<128x128xbf16>, vector<24x128xf32> -> vector<24x128xf32>
    %c0_8 = arith.constant 0 : index
    %c0_9 = arith.constant 0 : index
    %c0_10 = arith.constant 0 : index
    %7 = vector.load %arg4[%c0_8, %c0_9, %c0_10] : memref<1x24x128xf32, #tpu.memory_space<vmem>>, vector<1x24x128xf32>
    %8 = vector.shape_cast %7 : vector<1x24x128xf32> to vector<24x128xf32>
    %9 = vector.shape_cast %6 : vector<24x128xf32> to vector<1x24x128xf32>
    tpu.vector_store %arg4[%c0_8, %c0_9, %c0_10], %9 {strides = array<i32>} : memref<1x24x128xf32, #tpu.memory_space<vmem>>, vector<1x24x128xf32>,
    return
  }
  func.func @transform_0(%arg0: i32, %arg1: i32) -> (i32, i32, i32, i32) {
    %c0_i32 = arith.constant 0 : i32
    %c0_i32_0 = arith.constant 0 : i32
    %c0_i32_1 = arith.constant 0 : i32
    return %arg0, %arg1, %c0_i32, %c0_i32_0 : i32, i32, i32, i32
  }
  func.func @transform_1(%arg0: i32, %arg1: i32) -> (i32, i32) {
    %c0_i32 = arith.constant 0 : i32
    %c0_i32_0 = arith.constant 0 : i32
    %c0_i32_1 = arith.constant 0 : i32
    return %c0_i32, %c0_i32_0 : i32, i32
  }
  func.func @transform_2(%arg0: i32, %arg1: i32) -> (i32, i32, i32) {
    %c0_i32 = arith.constant 0 : i32
    %c0_i32_0 = arith.constant 0 : i32
    return %arg0, %c0_i32, %arg1 : i32, i32, i32
  }
}

module attributes {stable_mosaic.version = 11 : i64} {
  func.func @conv_kernel(%arg0: i32, %arg1: i32, %arg2: memref<1x1x132x32xbf16, #tpu.memory_space<vmem>>, %arg3: memref<24x128xbf16, #tpu.memory_space<vmem>>, %arg4: memref<1x24x128xf32, #tpu.memory_space<vmem>>) attributes {dimension_semantics = [#tpu.dimension_semantics<parallel>, #tpu.dimension_semantics<parallel>], iteration_bounds = array<i64: 2, 1>, scalar_prefetch = 0 : i64, scratch_operands = 0 : i64, tpu.core_type = #tpu.core_type<tc>, window_params = [{transform_indices = @transform_0, window_bounds = array<i64: 1, 1, 132, 32>}, {pipeline_mode = #tpu.pipeline_mode<synchronous>, transform_indices = @transform_1, window_bounds = array<i64: 24, 128>}, {transform_indices = @transform_2, window_bounds = array<i64: 1, 24, 128>}]} {
    %c0 = arith.constant 0 : index
    %c0_0 = arith.constant 0 : index
    %0 = vector.load %arg3[%c0, %c0_0] : memref<24x128xbf16, #tpu.memory_space<vmem>>, vector<24x128xbf16>
    %c0_1 = arith.constant 0 : index
    %c0_2 = arith.constant 0 : index
    %c0_3 = arith.constant 0 : index
    %c0_4 = arith.constant 0 : index
    %1 = vector.load %arg2[%c0_1, %c0_2, %c0_3, %c0_4] : memref<1x1x132x32xbf16, #tpu.memory_space<vmem>>, vector<1x1x128x32xbf16>
    %2 = vector.shape_cast %1 : vector<1x1x128x32xbf16> to vector<128x32xbf16>
    %c0_5 = arith.constant 0 : index
    %c0_6 = arith.constant 0 : index
    %c1 = arith.constant 1 : index
    %c0_7 = arith.constant 0 : index
    %3 = vector.load %arg2[%c0_5, %c0_6, %c1, %c0_7] : memref<1x1x132x32xbf16, #tpu.memory_space<vmem>>, vector<1x1x128x32xbf16>
    %4 = vector.shape_cast %3 : vector<1x1x128x32xbf16> to vector<128x32xbf16>
    %c0_8 = arith.constant 0 : index
    %c0_9 = arith.constant 0 : index
    %c2 = arith.constant 2 : index
    %c0_10 = arith.constant 0 : index
    %5 = vector.load %arg2[%c0_8, %c0_9, %c2, %c0_10] : memref<1x1x132x32xbf16, #tpu.memory_space<vmem>>, vector<1x1x128x32xbf16>
    %6 = vector.shape_cast %5 : vector<1x1x128x32xbf16> to vector<128x32xbf16>
    %c0_11 = arith.constant 0 : index
    %c0_12 = arith.constant 0 : index
    %c3 = arith.constant 3 : index
    %c0_13 = arith.constant 0 : index
    %7 = vector.load %arg2[%c0_11, %c0_12, %c3, %c0_13] : memref<1x1x132x32xbf16, #tpu.memory_space<vmem>>, vector<1x1x128x32xbf16>
    %8 = vector.shape_cast %7 : vector<1x1x128x32xbf16> to vector<128x32xbf16>
    %9 = tpu.concatenate %2, %4, %6, %8 in 1 : vector<128x32xbf16>, vector<128x32xbf16>, vector<128x32xbf16>, vector<128x32xbf16> -> vector<128x128xbf16>
    %cst = arith.constant dense<0.000000e+00> : vector<24x128xf32>
    %10 = tpu.matmul %0, %9, %cst {dimension_numbers = #tpu.dot_dimension_numbers<[1], [1], [0], [0], [0, 0, 1, 0], [], []>} : vector<24x128xbf16>, vector<128x128xbf16>, vector<24x128xf32> -> vector<24x128xf32>
    %c0_14 = arith.constant 0 : index
    %c0_15 = arith.constant 0 : index
    %c0_16 = arith.constant 0 : index
    %11 = vector.load %arg4[%c0_14, %c0_15, %c0_16] : memref<1x24x128xf32, #tpu.memory_space<vmem>>, vector<1x24x128xf32>
    %12 = vector.shape_cast %11 : vector<1x24x128xf32> to vector<24x128xf32>
    %13 = vector.shape_cast %10 : vector<24x128xf32> to vector<1x24x128xf32>
    tpu.vector_store %arg4[%c0_14, %c0_15, %c0_16], %13 {strides = array<i32>} : memref<1x24x128xf32, #tpu.memory_space<vmem>>, vector<1x24x128xf32>,
    return
  }
  func.func @transform_0(%arg0: i32, %arg1: i32) -> (i32, i32, i32, i32) {
    %c0_i32 = arith.constant 0 : i32
    %c0_i32_0 = arith.constant 0 : i32
    %c0_i32_1 = arith.constant 0 : i32
    return %arg0, %arg1, %c0_i32, %c0_i32_0 : i32, i32, i32, i32
  }
  func.func @transform_1(%arg0: i32, %arg1: i32) -> (i32, i32) {
    %c0_i32 = arith.constant 0 : i32
    %c0_i32_0 = arith.constant 0 : i32
    %c0_i32_1 = arith.constant 0 : i32
    return %c0_i32, %c0_i32_0 : i32, i32
  }
  func.func @transform_2(%arg0: i32, %arg1: i32) -> (i32, i32, i32) {
    %c0_i32 = arith.constant 0 : i32
    %c0_i32_0 = arith.constant 0 : i32
    return %arg0, %c0_i32, %arg1 : i32, i32, i32
  }
}

</mosaic_0001>

<llo_original>
// kernel: custom-call.9
$region0: #{custom-call.9}
  %s0 = inlined_call_operand.vmem [shape: f32[2,2], index: 0, kind: output, shape index: {}]

// kernel: _lambda_.2
$region0: #{_lambda_.2}
  #allocation0 [shape = 'u32[]', space=smem, size = 0x4, offset = 0x4, fixed_abs, tag = 'smem constant byte address 0x4 - core index']
  #allocation1 [shape = 'u32[144,128]{1,0:T(1,128)}', space=vmem, size = 0x12000, scoped, tag = 'internal scratch']
  %s0 = inlined_call_operand.vmem [shape: bf16[2,1,130,64], index: 0, kind: input, shape index: {}]
  %s1 = inlined_call_operand.vmem [shape: bf16[24,128], index: 1, kind: input, shape index: {}]
  %s2 = inlined_call_operand.vmem [shape: f32[2,24,128], index: 2, kind: output, shape index: {}]
  %s3 = sld [smem:[#allocation0]]
  $region41: #{_lambda_.2} parent=0
    _
  %s5 = ssub.s32 1, %s3
  %s6 = scalar_select 0, %s5, %s3
  loop: start=0, step=1, limit=4
  $region2: #{_lambda_.2} parent=0 // loop_pre_header
    _
  $region3: #{_lambda_.2} parent=0 // loop_header
    %s8 = sphi 0, %s12
    %p9 = scmp.ge.s32.totalorder %s8, 4
    %s15 = sphi 0, %s27
    %s16 = sphi 0, %s23
    %s17 = sphi 0, %s15
    %s18 = sphi 0, %s16
    %s19 = sphi 0, %s17
    %s20 = sphi 0, %s18
    %s32 = sphi 0, %s34
    %s35 = sphi 0, %s32
    %s36 = sphi 0, %s35
    %s52 = sphi 0, %s36
    %s56 = sphi 0, %s56
    %s58 = sphi 0, %s56
    %s59 = sphi 0, %s58
    %s73 = sphi 0, %s59
    %s81 = sphi 0, %s83
    %s84 = sphi 0, %s81
    %s85 = sphi 0, %s84
    %s101 = sphi 0, %s85
  $region4: #{_lambda_.2} parent=0 // loop_header_branch
    %11 = sbr.rel (%p9) target = $region8
  $region5: #{_lambda_.2} parent=0 // loop_body
    %s13 = ssub.s32 %s8, 1
    %s14 = ssub.s32 %s8, 2
    %s21 = sadd.s32 1, %s16
    %p22 = scmp.ge.s32.totalorder %s21, 1
    %s23 = scalar_select %p22, 0, %s21
    %s24 = sadd.s32 1, %s15
    %s25 = scalar_select %p22, %s24, %s15
    %p26 = scmp.ge.s32.totalorder %s25, 2
    %s27 = scalar_select %p26, 0, %s25
    %s28 = ssub.s32 %s15, %s27
    %s29 = ssub.s32 %s16, %s23
    %s30 = sor.u32 %s28, %s29
    %p31 = scmp.eq.s32.totalorder %s30, 0
    %s33 = sadd.s32 %s32, 1
    %s34 = scalar_select %p31, %s32, %s33
    %p37 = pneg %p31
    %p38 = scmp.eq.s32.totalorder %s8, 1
    %p39 = por %p37, %p38
    %p40 = scmp.ne.s32.totalorder %s32, %s35
    %p41 = scmp.eq.s32.totalorder %s8, 0
    %p42 = por %p40, %p41
    %p43 = scmp.ne.s32.totalorder %s32, %s35
    %p44 = scmp.eq.s32.totalorder %s13, 1
    %p45 = por %p43, %p44
    %p46 = scmp.ne.s32.totalorder %s35, %s36
    %p47 = scmp.eq.s32.totalorder %s13, 0
    %p48 = por %p46, %p47
    %p49 = scmp.ne.s32.totalorder %s35, %s36
    %p50 = scmp.eq.s32.totalorder %s14, 1
    %p51 = por %p49, %p50
    %p53 = scmp.ne.s32.totalorder %s36, %s52
    %p54 = scmp.eq.s32.totalorder %s14, 0
    %p55 = por %p53, %p54
    %s57 = sadd.s32 %s56, 1
    %p60 = scmp.eq.s32.totalorder %s8, 1
    %p61 = scmp.ne.s32.totalorder %s56, %s58
    %p62 = scmp.eq.s32.totalorder %s8, 0
    %p63 = por %p61, %p62
    %p64 = scmp.ne.s32.totalorder %s56, %s58
    %p65 = scmp.eq.s32.totalorder %s13, 1
    %p66 = por %p64, %p65
    %p67 = scmp.ne.s32.totalorder %s58, %s59
    %p68 = scmp.eq.s32.totalorder %s13, 0
    %p69 = por %p67, %p68
    %p70 = scmp.ne.s32.totalorder %s58, %s59
    %p71 = scmp.eq.s32.totalorder %s14, 1
    %p72 = por %p70, %p71
    %p74 = scmp.ne.s32.totalorder %s59, %s73
    %p75 = scmp.eq.s32.totalorder %s14, 0
    %p76 = por %p74, %p75
    %s77 = ssub.s32 %s15, %s27
    %s78 = ssub.s32 %s16, %s23
    %s79 = sor.u32 %s77, %s78
    %p80 = scmp.eq.s32.totalorder %s79, 0
    %s82 = sadd.s32 %s81, 1
    %s83 = scalar_select %p80, %s81, %s82
    %p86 = pneg %p80
    %p87 = scmp.eq.s32.totalorder %s8, 1
    %p88 = por %p86, %p87
    %p89 = scmp.ne.s32.totalorder %s81, %s84
    %p90 = scmp.eq.s32.totalorder %s8, 0
    %p91 = por %p89, %p90
    %p92 = scmp.ne.s32.totalorder %s81, %s84
    %p93 = scmp.eq.s32.totalorder %s13, 1
    %p94 = por %p92, %p93
    %p95 = scmp.ne.s32.totalorder %s84, %s85
    %p96 = scmp.eq.s32.totalorder %s13, 0
    %p97 = por %p95, %p96
    %p98 = scmp.ne.s32.totalorder %s84, %s85
    %p99 = scmp.eq.s32.totalorder %s14, 1
    %p100 = por %p98, %p99
    %p102 = scmp.ne.s32.totalorder %s85, %s101
    %p103 = scmp.eq.s32.totalorder %s14, 0
    %p104 = por %p102, %p103
    %p105 = scmp.le.s32.totalorder 1, %s8
    %p106 = scmp.lt.s32.totalorder %s8, 3
    %p107 = pnand %p105, %p106
    %p108 = pneg %p107
    // Predicated region
    $region9: #{_lambda_.2} parent=5 // pred_check
      _
    $region10: #{_lambda_.2} parent=5 // pred_check_branch
      %110 = sbr.rel (%p107) target = $region12
    $region11: #{_lambda_.2} parent=5 // pred_region
      %s111 = ssub.s32 %s8, 1
      // Predicated region
      $region13: #{_lambda_.2} parent=11 // pred_check
        %p112 = pneg %p69
      $region14: #{_lambda_.2} parent=11 // pred_check_branch
        %114 = sbr.rel (%p112) target = $region16
      $region15: #{_lambda_.2} parent=11 // pred_region
        _
      $region16: #{_lambda_.2} parent=11 // pred_fallthru
        _
    $region12: #{_lambda_.2} parent=5 // pred_fallthru
      _
    %p115 = scmp.lt.s32.totalorder %s8, 2
    // Predicated region
    $region17: #{_lambda_.2} parent=5 // pred_check
      %p116 = pneg %p115
    $region18: #{_lambda_.2} parent=5 // pred_check_branch
      %118 = sbr.rel (%p116) target = $region20
    $region19: #{_lambda_.2} parent=5 // pred_region
      // Predicated region
      $region21: #{_lambda_.2} parent=19 // pred_check
        %p119 = pneg %p42
      $region22: #{_lambda_.2} parent=19 // pred_check_branch
        %121 = sbr.rel (%p119) target = $region24
      $region23: #{_lambda_.2} parent=19 // pred_region
        %p122 = scmp.lt.s32.totalorder %s15, 1
        %s123 = scalar_select %p122, %s15, 1
        %p124 = scmp.lt.s32.totalorder %s16, 0
        %s125 = scalar_select %p124, %s16, 0
        %s126 = smul.addr %s125, 17
        %s127 = smul.addr %s123, 17
        %s128 = sadd.s32 %s126, %s127
        %s129 = smul.addr %s128, 4
        %s130 = scalar_lea.vmem %s0, %s129
      $region24: #{_lambda_.2} parent=19 // pred_fallthru
        _
    $region20: #{_lambda_.2} parent=5 // pred_fallthru
      _
    %p131 = scmp.le.s32.totalorder 1, %s8
    %p132 = scmp.lt.s32.totalorder %s8, 3
    %p133 = pnand %p131, %p132
    %p134 = pneg %p133
    // Predicated region
    $region25: #{_lambda_.2} parent=5 // pred_check
      _
    $region26: #{_lambda_.2} parent=5 // pred_check_branch
      %136 = sbr.rel (%p133) target = $region28
    $region27: #{_lambda_.2} parent=5 // pred_region
      %s137 = ssub.s32 %s8, 1
      %p138 = scmp.lt.s32.totalorder %s17, 1
      %s139 = scalar_select %p138, %s17, 1
      %p140 = scmp.lt.s32.totalorder %s18, 0
      %s141 = scalar_select %p140, %s18, 0
      %s142 = smul.addr %s141, 17
      %s143 = smul.addr %s139, 17
      %s144 = sadd.s32 %s142, %s143
      %s145 = smul.addr %s144, 4
      %s146 = scalar_lea.vmem %s0, %s145
      %p147 = pneg %p48
      %p148 = pneg %p45
      %p149 = pneg %p69
      %p150 = pneg %p66
      %p151 = pneg %p97
      %p152 = pneg %p94
      %p153 = scmp.lt.s32.totalorder %s17, 1
      %s154 = scalar_select %p153, %s17, 1
      %p155 = scmp.lt.s32.totalorder %s18, 0
      %s156 = scalar_select %p155, %s18, 0
      %s157 = smul.addr %s154, 3
      %s158 = sadd.s32 %s156, %s157
      %s159 = smul.addr %s158, 8
      %s160 = scalar_lea.vmem %s2, %s159
      %p161 = scmp.lt.s32.totalorder %s17, 1
      %s162 = scalar_select %p161, %s17, 1
      %p163 = scmp.lt.s32.totalorder %s18, 0
      %s164 = scalar_select %p163, %s18, 0
      %s165 = smul.addr %s164, 17
      %s166 = smul.addr %s162, 17
      %s167 = sadd.s32 %s165, %s166
      %s168 = smul.addr %s167, 4
      %s169 = scalar_lea.vmem %s0, %s168
      %p170 = scmp.lt.s32.totalorder %s17, 1
      %s171 = scalar_select %p170, %s17, 1
      %p172 = scmp.lt.s32.totalorder %s18, 0
      %s173 = scalar_select %p172, %s18, 0
      %s174 = smul.addr %s171, 3
      %s175 = sadd.s32 %s173, %s174
      %s176 = smul.addr %s175, 8
      %s177 = scalar_lea.vmem %s2, %s176
      %v179 = vld [vmem:[%s1] sm:$0xf]
      %v180 = vld [vmem:[%s1 + $0x4] sm:$0xf]
      %v181 = vld [vmem:[%s1 + $0x8] sm:$0xf]
      %v182 = vld [vmem:[%s169] sm:$0xf]
      %v183 = vld [vmem:[%s169 + $0x4] sm:$0xf]
      %v184 = vld [vmem:[%s169 + $0x8] sm:$0xf]
      %v185 = vld [vmem:[%s169 + $0xc] sm:$0xf]
      %v186 = vld [vmem:[%s169 + $0x10] sm:$0xf]
      %v187 = vld [vmem:[%s169 + $0x14] sm:$0xf]
      %v188 = vld [vmem:[%s169 + $0x18] sm:$0xf]
      %v189 = vld [vmem:[%s169 + $0x1c] sm:$0xf]
      %v190 = vld [vmem:[%s169 + $0x20] sm:$0xf]
      %v191 = vld [vmem:[%s169 + $0x24] sm:$0xf]
      %v192 = vld [vmem:[%s169 + $0x28] sm:$0xf]
      %v193 = vld [vmem:[%s169 + $0x2c] sm:$0xf]
      %v194 = vld [vmem:[%s169 + $0x30] sm:$0xf]
      %v195 = vld [vmem:[%s169 + $0x34] sm:$0xf]
      %v196 = vld [vmem:[%s169 + $0x38] sm:$0xf]
      %v197 = vld [vmem:[%s169 + $0x3c] sm:$0xf]
      %v198 = vld [vmem:[%s169 + $0x40] sm:$0x1]
      %v215 = vunpack.c.l.b16 %v182
      %v216 = vunpack.c.l.b16 %v183
      %v217 = vunpack.c.l.b16 %v184
      %v218 = vunpack.c.l.b16 %v185
      %v219 = vunpack.c.l.b16 %v186
      %v220 = vunpack.c.l.b16 %v187
      %v221 = vunpack.c.l.b16 %v188
      %v222 = vunpack.c.l.b16 %v189
      %v223 = vunpack.c.l.b16 %v190
      %v224 = vunpack.c.l.b16 %v191
      %v225 = vunpack.c.l.b16 %v192
      %v226 = vunpack.c.l.b16 %v193
      %v227 = vunpack.c.l.b16 %v194
      %v228 = vunpack.c.l.b16 %v195
      %v229 = vunpack.c.l.b16 %v196
      %v230 = vunpack.c.l.b16 %v197
      %v231 = vpack.c.b16 %v216, %v215
      %v232 = vpack.c.b16 %v218, %v217
      %v233 = vpack.c.b16 %v220, %v219
      %v234 = vpack.c.b16 %v222, %v221
      %v235 = vpack.c.b16 %v224, %v223
      %v236 = vpack.c.b16 %v226, %v225
      %v237 = vpack.c.b16 %v228, %v227
      %v238 = vpack.c.b16 %v230, %v229
      %v240 = vunpack.c.l.b16 %v198
      %v241 = vpack.c.b16 %v240, %v240
      %vm242 = vsmask.f32 7424
      %v244 = vshrl.u32 %v231, 16
      %v246 = vshll.u32 %v231, 16
      %v248 = vrot.slane %v246, 1
      %v249 = vor.u32 %v244, %v248
      %v251 = vshll.u32 %v232, 16
      %v253 = vrot.slane %v251, 1
      %v254 = vsel %vm242, %v249, %v253
      %v255 = vshrl.u32 %v232, 16
      %v257 = vor.u32 %v255, %v253
      %v259 = vshll.u32 %v233, 16
      %v261 = vrot.slane %v259, 1
      %v262 = vsel %vm242, %v257, %v261
      %v263 = vshrl.u32 %v233, 16
      %v265 = vor.u32 %v263, %v261
      %v267 = vshll.u32 %v234, 16
      %v269 = vrot.slane %v267, 1
      %v270 = vsel %vm242, %v265, %v269
      %v271 = vshrl.u32 %v234, 16
      %v273 = vor.u32 %v271, %v269
      %v275 = vshll.u32 %v235, 16
      %v277 = vrot.slane %v275, 1
      %v278 = vsel %vm242, %v273, %v277
      %v279 = vshrl.u32 %v235, 16
      %v281 = vor.u32 %v279, %v277
      %v283 = vshll.u32 %v236, 16
      %v285 = vrot.slane %v283, 1
      %v286 = vsel %vm242, %v281, %v285
      %v287 = vshrl.u32 %v236, 16
      %v289 = vor.u32 %v287, %v285
      %v291 = vshll.u32 %v237, 16
      %v293 = vrot.slane %v291, 1
      %v294 = vsel %vm242, %v289, %v293
      %v295 = vshrl.u32 %v237, 16
      %v297 = vor.u32 %v295, %v293
      %v299 = vshll.u32 %v238, 16
      %v301 = vrot.slane %v299, 1
      %v302 = vsel %vm242, %v297, %v301
      %v303 = vshrl.u32 %v238, 16
      %v305 = vor.u32 %v303, %v301
      %v307 = vshll.u32 %v241, 16
      %v309 = vrot.slane %v307, 1
      %v310 = vsel %vm242, %v305, %v309
      %311 = vrot.lane.b32.xlu0 %v254, 64
      %v312 = vpop.permute.xlu0 %311
      %313 = vrot.lane.b32.xlu0 %v262, 64
      %v314 = vpop.permute.xlu0 %313
      %315 = vrot.lane.b32.xlu0 %v270, 64
      %v316 = vpop.permute.xlu0 %315
      %317 = vrot.lane.b32.xlu0 %v278, 64
      %v318 = vpop.permute.xlu0 %317
      %319 = vrot.lane.b32.xlu0 %v286, 64
      %v320 = vpop.permute.xlu0 %319
      %321 = vrot.lane.b32.xlu0 %v294, 64
      %v322 = vpop.permute.xlu0 %321
      %323 = vrot.lane.b32.xlu0 %v302, 64
      %v324 = vpop.permute.xlu0 %323
      %325 = vrot.lane.b32.xlu0 %v310, 64
      %v326 = vpop.permute.xlu0 %325
      %vm327 = vcmask 523264
      %v329 = vsel %vm327, %v231, %v312
      %v332 = vsel %vm327, %v232, %v314
      %v335 = vsel %vm327, %v233, %v316
      %v338 = vsel %vm327, %v234, %v318
      %v341 = vsel %vm327, %v235, %v320
      %v344 = vsel %vm327, %v236, %v322
      %v347 = vsel %vm327, %v237, %v324
      %v350 = vsel %vm327, %v238, %v326
      %v355 = vunpack.c.l.b16 %v179
      %v356 = vunpack.c.l.b16 %v180
      %v357 = vunpack.c.l.b16 %v181
      %v358 = vpack.c.b16 %v356, %v355
      %v359 = vpack.c.b16 %v357, %v357
      %362 = vmatprep.subr.bf16.mxu0 0
      %363 = vmatpush1.bf16.xpose.msra.mxu0 %v329
      %364 = vmatprep.subr.bf16.mxu0 0
      %365 = vmatpush1.bf16.xpose.msra.mxu0 %v332
      %366 = vmatprep.subr.bf16.mxu0 0
      %367 = vmatpush1.bf16.xpose.msra.mxu0 %v335
      %368 = vmatprep.subr.bf16.mxu0 0
      %369 = vmatpush1.bf16.xpose.msra.mxu0 %v338
      %370 = vmatprep.subr.bf16.mxu0 0
      %371 = vmatpush1.bf16.xpose.msra.mxu0 %v341
      %372 = vmatprep.subr.bf16.mxu0 0
      %373 = vmatpush1.bf16.xpose.msra.mxu0 %v344
      %374 = vmatprep.subr.bf16.mxu0 0
      %375 = vmatpush1.bf16.xpose.msra.mxu0 %v347
      %376 = vmatprep.subr.bf16.mxu0 0
      %377 = vmatpush1.bf16.xpose.msra.mxu0 %v350
      %378 = vmatprep.subr.bf16.mxu0 0
      %379 = vmatpush1.bf16.xpose.msra.mxu0 0
      %380 = vmatprep.subr.bf16.mxu0 0
      %381 = vmatpush1.bf16.xpose.msra.mxu0 0
      %382 = vmatprep.subr.bf16.mxu0 0
      %383 = vmatpush1.bf16.xpose.msra.mxu0 0
      %384 = vmatprep.subr.bf16.mxu0 0
      %385 = vmatpush1.bf16.xpose.msra.mxu0 0
      %386 = vmatprep.subr.bf16.mxu0 0
      %387 = vmatpush1.bf16.xpose.msra.mxu0 0
      %388 = vmatprep.subr.bf16.mxu0 0
      %389 = vmatpush1.bf16.xpose.msra.mxu0 0
      %390 = vmatprep.subr.bf16.mxu0 0
      %391 = vmatpush1.bf16.xpose.msra.mxu0 0
      %392 = vmatprep.subr.bf16.mxu0 0
      %393 = vmatpush1.bf16.xpose.msra.mxu0 0
      %394 = vmatprep.mubr.bf16.mxu0 0
      %395 = vmatmul.mubr.bf16.gmra.mrb[0].mxu0 %v358
      %v396 = vpop.f32.mrb[0].mxu0
      %v397 = vadd.f32 0.0, %v396
      %v398 = vpop.f32.mrb[0].mxu0
      %v399 = vpop.f32.mrb[0].mxu0
      %v400 = vadd.f32 0.0, %v399
      %v401 = vpop.f32.mrb[0].mxu0
      %402 = vmatprep.mubr.bf16.mxu0 0
      %403 = vmatmul.mubr.bf16.gmra.mrb[0].mxu0 %v359
      %v404 = vpop.f32.mrb[0].mxu0
      %v405 = vadd.f32 0.0, %v404
      %v406 = vpop.f32.mrb[0].mxu0
      %v407 = vpop.f32.mrb[0].mxu0
      %v408 = vpop.f32.mrb[0].mxu0
      %409 = vdwg.mxu0
      %410 = vst [vmem:[%s177] sm:$0xff] %v397
      %411 = vst [vmem:[%s177 + $0x8] sm:$0xff] %v400
      %412 = vst [vmem:[%s177 + $0x10] sm:$0xff] %v405
      %p413 = scmp.lt.s32.totalorder %s17, 1
      %s414 = scalar_select %p413, %s17, 1
      %p415 = scmp.lt.s32.totalorder %s18, 0
      %s416 = scalar_select %p415, %s18, 0
      %s417 = smul.addr %s414, 3
      %s418 = sadd.s32 %s416, %s417
      %s419 = smul.addr %s418, 8
      %s420 = scalar_lea.vmem %s2, %s419
      // Predicated region
      $region29: #{_lambda_.2} parent=27 // pred_check
        %p421 = pneg %p94
      $region30: #{_lambda_.2} parent=27 // pred_check_branch
        %423 = sbr.rel (%p421) target = $region32
      $region31: #{_lambda_.2} parent=27 // pred_region
        _
      $region32: #{_lambda_.2} parent=27 // pred_fallthru
        _
    $region28: #{_lambda_.2} parent=5 // pred_fallthru
      _
    %p424 = scmp.le.s32.totalorder 2, %s8
    // Predicated region
    $region33: #{_lambda_.2} parent=5 // pred_check
      %p425 = pneg %p424
    $region34: #{_lambda_.2} parent=5 // pred_check_branch
      %427 = sbr.rel (%p425) target = $region36
    $region35: #{_lambda_.2} parent=5 // pred_region
      %s428 = ssub.s32 %s8, 2
      // Predicated region
      $region37: #{_lambda_.2} parent=35 // pred_check
        %p429 = pneg %p100
      $region38: #{_lambda_.2} parent=35 // pred_check_branch
        %431 = sbr.rel (%p429) target = $region40
      $region39: #{_lambda_.2} parent=35 // pred_region
        %p432 = scmp.lt.s32.totalorder %s19, 1
        %s433 = scalar_select %p432, %s19, 1
        %p434 = scmp.lt.s32.totalorder %s20, 0
        %s435 = scalar_select %p434, %s20, 0
        %s436 = smul.addr %s433, 3
        %s437 = sadd.s32 %s435, %s436
        %s438 = smul.addr %s437, 8
        %s439 = scalar_lea.vmem %s2, %s438
      $region40: #{_lambda_.2} parent=35 // pred_fallthru
        _
    $region36: #{_lambda_.2} parent=5 // pred_fallthru
      _
  $region6: #{_lambda_.2} parent=0 // loop_footer
    %s12 = sadd.s32 1, %s8
  $region7: #{_lambda_.2} parent=0 // loop_footer_branch
    %7 = sbr.rel target = $region3
  $region8: #{_lambda_.2} parent=0 // loop_exit
    _

// kernel: reverse
$region0: #{reverse}
  %s0 = inlined_call_operand.vmem [shape: bf16[2,1024], index: 0, kind: input, shape index: {}]
  %s1 = inlined_call_operand.vmem [shape: bf16[2,1024], index: 1, kind: output, shape index: {}]
  %v2 = vlaneseq
  %v3 = vsub.s32 127, %v2
  %4 = vset.pattern.permute.xlu0 %v3
  $region1: #{reverse} parent=0
    #allocation0 [shape = 'u8[4096]{0}', space=vmem, size = 0x1000, scoped, tag = 'operand span for operand 0']
    #allocation1 [shape = 'u8[1024]{0}', space=vmem, size = 0x400, scoped, tag = 'packed  for operand 0']
    #allocation2 [shape = 'u8[4096]{0}', space=vmem, size = 0x1000, scoped, tag = 'operand span for operand 1']
    #allocation3 [shape = 'u8[1024]{0}', space=vmem, size = 0x400, scoped, tag = 'packed  for operand 1']
    loop: start=0, step=1, limit=10
    $region2: #{reverse} parent=1 // loop_pre_header
      _
    $region3: #{reverse} parent=1 // loop_header
      %s6 = sphi 0, %s10
      %p7 = scmp.ge.s32.totalorder %s6, 10
      %s13 = sphi 0, %s25
      %s14 = sphi 0, %s21
      %s15 = sphi 0, %s13
      %s16 = sphi 0, %s14
      %s17 = sphi 0, %s15
      %s18 = sphi 0, %s16
    $region4: #{reverse} parent=1 // loop_header_branch
      %9 = sbr.rel (%p7) target = $region8
    $region5: #{reverse} parent=1 // loop_body
      %s11 = ssub.s32 %s6, 1
      %s12 = ssub.s32 %s6, 2
      %s19 = sadd.s32 1, %s14
      %p20 = scmp.ge.s32.totalorder %s19, 8
      %s21 = scalar_select %p20, 0, %s19
      %s22 = sadd.s32 1, %s13
      %s23 = scalar_select %p20, %s22, %s13
      %p24 = scmp.ge.s32.totalorder %s23, 1
      %s25 = scalar_select %p24, 0, %s23
      %p26 = scmp.le.s32.totalorder 1, %s6
      %p27 = scmp.lt.s32.totalorder %s6, 9
      %p28 = pnand %p26, %p27
      %p29 = pneg %p28
      // Predicated region
      $region9: #{reverse} parent=5 // pred_check
        _
      $region10: #{reverse} parent=5 // pred_check_branch
        %31 = sbr.rel (%p28) target = $region12
      $region11: #{reverse} parent=5 // pred_region
        %s32 = ssub.s32 %s6, 1
      $region12: #{reverse} parent=5 // pred_fallthru
        _
      %p33 = scmp.lt.s32.totalorder %s6, 8
      // Predicated region
      $region13: #{reverse} parent=5 // pred_check
        %p34 = pneg %p33
      $region14: #{reverse} parent=5 // pred_check_branch
        %36 = sbr.rel (%p34) target = $region16
      $region15: #{reverse} parent=5 // pred_region
        %s37 = sand.u32 %s6, 1
        %s38 = sand.u32 %s6, 1
        %s39 = scalar_lea.vmem [#allocation1], %s38
        %s40 = ssub.s32 7, %s14
        %s41 = smul.addr %s13, 8
        %s42 = sadd.s32 %s40, %s41
        %s43 = scalar_lea.vmem %s0, %s42
        // Predicated region
        $region17: #{reverse} parent=15 // pred_check
          _
        $region18: #{reverse} parent=15 // pred_check_branch
          %45 = sbr.rel (0) target = $region20
        $region19: #{reverse} parent=15 // pred_region
          // Predicated region
          $region21: #{reverse} parent=19 // pred_check
            _
          $region22: #{reverse} parent=19 // pred_check_branch
            %47 = sbr.rel target = $region24
          $region23: #{reverse} parent=19 // pred_region
            // Predicated region
            $region36: #{reverse} parent=23 // pred_check
              _
            $region37: #{reverse} parent=23 // pred_check_branch
              %62 = sbr.rel (0) target = $region39
            $region38: #{reverse} parent=23 // pred_region
              loop: start=0, step=1, limit=1
              $region40: #{reverse} parent=38 // loop_pre_header
                _
              $region41: #{reverse} parent=38 // loop_header
                %s65 = sphi 0, %s69
                %p66 = scmp.ge.s32.totalorder %s65, 1
                %s70 = sphi %s43, %s43
                %s71 = sphi %s39, %s39
              $region42: #{reverse} parent=38 // loop_header_branch
                %68 = sbr.rel (%p66) target = $region46
              $region43: #{reverse} parent=38 // loop_body
                %v72 = vld [vmem:[%s70] sm:$0x1]
                %73 = vst [vmem:[%s71] sm:$0x1] %v72
              $region44: #{reverse} parent=38 // loop_footer
                %s69 = sadd.s32 1, %s65
              $region45: #{reverse} parent=38 // loop_footer_branch
                %64 = sbr.rel target = $region41
              $region46: #{reverse} parent=38 // loop_exit
                _
            $region39: #{reverse} parent=23 // pred_fallthru
              _
          $region24: #{reverse} parent=19 // pred_fallthru
            _
          // Predicated region
          $region25: #{reverse} parent=19 // pred_check
            _
          $region26: #{reverse} parent=19 // pred_check_branch
            %49 = sbr.rel (0) target = $region28
          $region27: #{reverse} parent=19 // pred_region
            loop: start=0, step=1, limit=1
            $region29: #{reverse} parent=27 // loop_pre_header
              _
            $region30: #{reverse} parent=27 // loop_header
              %s52 = sphi 0, %s56
              %p53 = scmp.ge.s32.totalorder %s52, 1
              %s57 = sphi %s43, %s43
              %s58 = sphi %s39, %s39
            $region31: #{reverse} parent=27 // loop_header_branch
              %55 = sbr.rel (%p53) target = $region35
            $region32: #{reverse} parent=27 // loop_body
              %v59 = vld [vmem:[%s57] sm:$0x1]
              %60 = vst [vmem:[%s58] sm:$0x1] %v59
            $region33: #{reverse} parent=27 // loop_footer
              %s56 = sadd.s32 1, %s52
            $region34: #{reverse} parent=27 // loop_footer_branch
              %51 = sbr.rel target = $region30
            $region35: #{reverse} parent=27 // loop_exit
              _
          $region28: #{reverse} parent=19 // pred_fallthru
            _
        $region20: #{reverse} parent=15 // pred_fallthru
          _
        %74 = vnop
      $region16: #{reverse} parent=5 // pred_fallthru
        _
      %p75 = scmp.le.s32.totalorder 1, %s6
      %p76 = scmp.lt.s32.totalorder %s6, 9
      %p77 = pnand %p75, %p76
      %p78 = pneg %p77
      // Predicated region
      $region47: #{reverse} parent=5 // pred_check
        _
      $region48: #{reverse} parent=5 // pred_check_branch
        %80 = sbr.rel (%p77) target = $region50
      $region49: #{reverse} parent=5 // pred_region
        %s81 = ssub.s32 %s6, 1
        %s82 = sand.u32 %s11, 1
        %s83 = sand.u32 %s11, 1
        %s84 = scalar_lea.vmem [#allocation1], %s83
        %s85 = sand.u32 %s11, 1
        %s86 = sand.u32 %s11, 1
        %s87 = scalar_lea.vmem [#allocation1], %s86
        %s88 = sand.u32 %s11, 1
        %s89 = sand.u32 %s11, 1
        %s90 = scalar_lea.vmem [#allocation3], %s89
        %s92 = smul.u32 1, 2
        %s93 = sshllo.u32 0, %s92
        %s94 = sshrl.u32 %s93, 1
        %s95 = sor.u32 %s93, %s94
        %s96 = sand.u32 %s95, 85
        %s97 = sshrl.u32 %s96, 1
        %s98 = sor.u32 %s96, %s97
        %s99 = sand.u32 51, %s98
        %s100 = sshrl.u32 %s99, 2
        %s101 = sor.u32 %s99, %s100
        %s102 = sand.u32 15, %s101
        %v103 = vld [vmem:[%s87] sm:%s102]
        %v104 = vunpack.c.l.bf16 %v103
        %v105 = vunpack.c.h.bf16 %v103
        %106 = vst [vmem:[#allocation0] sm:%s93] %v104
        %s107 = ssub.s32 7, %s16
        %v108 = vld [vmem:[#allocation0] sm:$0xff]
        %109 = vperm.xlu0 %4, %v108
        %v110 = vpop.permute.xlu0 %109
        %111 = vst [vmem:[#allocation2] sm:$0xff] %v110
        %s113 = smul.u32 1, 2
        %s114 = sshllo.u32 0, %s113
        %s115 = sshrl.u32 %s113, 1
        %v116 = vld [vmem:[#allocation2] sm:%s114]
        %v117 = vpack.c.bf16 0.0, %v116
        %s118 = sshllo.u32 0, %s115
        %119 = vst [vmem:[%s90] sm:%s118] %v117
        %s120 = sand.u32 %s11, 1
        %s121 = sand.u32 %s11, 1
        %s122 = scalar_lea.vmem [#allocation3], %s121
        %s123 = smul.addr %s15, 8
        %s124 = sadd.s32 %s16, %s123
        %s125 = scalar_lea.vmem %s1, %s124
        // Predicated region
        $region51: #{reverse} parent=49 // pred_check
          _
        $region52: #{reverse} parent=49 // pred_check_branch
          %127 = sbr.rel (0) target = $region54
        $region53: #{reverse} parent=49 // pred_region
          // Predicated region
          $region55: #{reverse} parent=53 // pred_check
            _
          $region56: #{reverse} parent=53 // pred_check_branch
            %129 = sbr.rel target = $region58
          $region57: #{reverse} parent=53 // pred_region
            // Predicated region
            $region70: #{reverse} parent=57 // pred_check
              _
            $region71: #{reverse} parent=57 // pred_check_branch
              %144 = sbr.rel (0) target = $region73
            $region72: #{reverse} parent=57 // pred_region
              loop: start=0, step=1, limit=1
              $region74: #{reverse} parent=72 // loop_pre_header
                _
              $region75: #{reverse} parent=72 // loop_header
                %s147 = sphi 0, %s151
                %p148 = scmp.ge.s32.totalorder %s147, 1
                %s152 = sphi %s122, %s122
                %s153 = sphi %s125, %s125
              $region76: #{reverse} parent=72 // loop_header_branch
                %150 = sbr.rel (%p148) target = $region80
              $region77: #{reverse} parent=72 // loop_body
                %v154 = vld [vmem:[%s152] sm:$0x1]
                %155 = vst [vmem:[%s153] sm:$0x1] %v154
              $region78: #{reverse} parent=72 // loop_footer
                %s151 = sadd.s32 1, %s147
              $region79: #{reverse} parent=72 // loop_footer_branch
                %146 = sbr.rel target = $region75
              $region80: #{reverse} parent=72 // loop_exit
                _
            $region73: #{reverse} parent=57 // pred_fallthru
              _
          $region58: #{reverse} parent=53 // pred_fallthru
            _
          // Predicated region
          $region59: #{reverse} parent=53 // pred_check
            _
          $region60: #{reverse} parent=53 // pred_check_branch
            %131 = sbr.rel (0) target = $region62
          $region61: #{reverse} parent=53 // pred_region
            loop: start=0, step=1, limit=1
            $region63: #{reverse} parent=61 // loop_pre_header
              _
            $region64: #{reverse} parent=61 // loop_header
              %s134 = sphi 0, %s138
              %p135 = scmp.ge.s32.totalorder %s134, 1
              %s139 = sphi %s122, %s122
              %s140 = sphi %s125, %s125
            $region65: #{reverse} parent=61 // loop_header_branch
              %137 = sbr.rel (%p135) target = $region69
            $region66: #{reverse} parent=61 // loop_body
              %v141 = vld [vmem:[%s139] sm:$0x1]
              %142 = vst [vmem:[%s140] sm:$0x1] %v141
            $region67: #{reverse} parent=61 // loop_footer
              %s138 = sadd.s32 1, %s134
            $region68: #{reverse} parent=61 // loop_footer_branch
              %133 = sbr.rel target = $region64
            $region69: #{reverse} parent=61 // loop_exit
              _
          $region62: #{reverse} parent=53 // pred_fallthru
            _
        $region54: #{reverse} parent=49 // pred_fallthru
          _
        %156 = vnop
      $region50: #{reverse} parent=5 // pred_fallthru
        _
      %p157 = scmp.le.s32.totalorder 2, %s6
      // Predicated region
      $region81: #{reverse} parent=5 // pred_check
        %p158 = pneg %p157
      $region82: #{reverse} parent=5 // pred_check_branch
        %160 = sbr.rel (%p158) target = $region84
      $region83: #{reverse} parent=5 // pred_region
        %s161 = ssub.s32 %s6, 2
        %s162 = sand.u32 %s12, 1
        %s163 = sand.u32 %s12, 1
        %s164 = scalar_lea.vmem [#allocation3], %s163
      $region84: #{reverse} parent=5 // pred_fallthru
        _
    $region6: #{reverse} parent=1 // loop_footer
      %s10 = sadd.s32 1, %s6
    $region7: #{reverse} parent=1 // loop_footer_branch
      %5 = sbr.rel target = $region3
    $region8: #{reverse} parent=1 // loop_exit
      _

// kernel: _lambda_.3
$region0: #{_lambda_.3}
  #allocation0 [shape = 'u32[]', space=smem, size = 0x4, offset = 0x4, fixed_abs, tag = 'smem constant byte address 0x4 - core index']
  #allocation1 [shape = 'u32[144,128]{1,0:T(1,128)}', space=vmem, size = 0x12000, scoped, tag = 'internal scratch']
  %s0 = inlined_call_operand.vmem [shape: bf16[2,1,132,32], index: 0, kind: input, shape index: {}]
  %s1 = inlined_call_operand.vmem [shape: bf16[24,128], index: 1, kind: input, shape index: {}]
  %s2 = inlined_call_operand.vmem [shape: f32[2,24,128], index: 2, kind: output, shape index: {}]
  %s3 = sld [smem:[#allocation0]]
  $region41: #{_lambda_.3} parent=0
    _
  %s5 = ssub.s32 1, %s3
  %s6 = scalar_select 0, %s5, %s3
  loop: start=0, step=1, limit=4
  $region2: #{_lambda_.3} parent=0 // loop_pre_header
    _
  $region3: #{_lambda_.3} parent=0 // loop_header
    %s8 = sphi 0, %s12
    %p9 = scmp.ge.s32.totalorder %s8, 4
    %s15 = sphi 0, %s27
    %s16 = sphi 0, %s23
    %s17 = sphi 0, %s15
    %s18 = sphi 0, %s16
    %s19 = sphi 0, %s17
    %s20 = sphi 0, %s18
    %s32 = sphi 0, %s34
    %s35 = sphi 0, %s32
    %s36 = sphi 0, %s35
    %s52 = sphi 0, %s36
    %s56 = sphi 0, %s56
    %s58 = sphi 0, %s56
    %s59 = sphi 0, %s58
    %s73 = sphi 0, %s59
    %s81 = sphi 0, %s83
    %s84 = sphi 0, %s81
    %s85 = sphi 0, %s84
    %s101 = sphi 0, %s85
  $region4: #{_lambda_.3} parent=0 // loop_header_branch
    %11 = sbr.rel (%p9) target = $region8
  $region5: #{_lambda_.3} parent=0 // loop_body
    %s13 = ssub.s32 %s8, 1
    %s14 = ssub.s32 %s8, 2
    %s21 = sadd.s32 1, %s16
    %p22 = scmp.ge.s32.totalorder %s21, 1
    %s23 = scalar_select %p22, 0, %s21
    %s24 = sadd.s32 1, %s15
    %s25 = scalar_select %p22, %s24, %s15
    %p26 = scmp.ge.s32.totalorder %s25, 2
    %s27 = scalar_select %p26, 0, %s25
    %s28 = ssub.s32 %s15, %s27
    %s29 = ssub.s32 %s16, %s23
    %s30 = sor.u32 %s28, %s29
    %p31 = scmp.eq.s32.totalorder %s30, 0
    %s33 = sadd.s32 %s32, 1
    %s34 = scalar_select %p31, %s32, %s33
    %p37 = pneg %p31
    %p38 = scmp.eq.s32.totalorder %s8, 1
    %p39 = por %p37, %p38
    %p40 = scmp.ne.s32.totalorder %s32, %s35
    %p41 = scmp.eq.s32.totalorder %s8, 0
    %p42 = por %p40, %p41
    %p43 = scmp.ne.s32.totalorder %s32, %s35
    %p44 = scmp.eq.s32.totalorder %s13, 1
    %p45 = por %p43, %p44
    %p46 = scmp.ne.s32.totalorder %s35, %s36
    %p47 = scmp.eq.s32.totalorder %s13, 0
    %p48 = por %p46, %p47
    %p49 = scmp.ne.s32.totalorder %s35, %s36
    %p50 = scmp.eq.s32.totalorder %s14, 1
    %p51 = por %p49, %p50
    %p53 = scmp.ne.s32.totalorder %s36, %s52
    %p54 = scmp.eq.s32.totalorder %s14, 0
    %p55 = por %p53, %p54
    %s57 = sadd.s32 %s56, 1
    %p60 = scmp.eq.s32.totalorder %s8, 1
    %p61 = scmp.ne.s32.totalorder %s56, %s58
    %p62 = scmp.eq.s32.totalorder %s8, 0
    %p63 = por %p61, %p62
    %p64 = scmp.ne.s32.totalorder %s56, %s58
    %p65 = scmp.eq.s32.totalorder %s13, 1
    %p66 = por %p64, %p65
    %p67 = scmp.ne.s32.totalorder %s58, %s59
    %p68 = scmp.eq.s32.totalorder %s13, 0
    %p69 = por %p67, %p68
    %p70 = scmp.ne.s32.totalorder %s58, %s59
    %p71 = scmp.eq.s32.totalorder %s14, 1
    %p72 = por %p70, %p71
    %p74 = scmp.ne.s32.totalorder %s59, %s73
    %p75 = scmp.eq.s32.totalorder %s14, 0
    %p76 = por %p74, %p75
    %s77 = ssub.s32 %s15, %s27
    %s78 = ssub.s32 %s16, %s23
    %s79 = sor.u32 %s77, %s78
    %p80 = scmp.eq.s32.totalorder %s79, 0
    %s82 = sadd.s32 %s81, 1
    %s83 = scalar_select %p80, %s81, %s82
    %p86 = pneg %p80
    %p87 = scmp.eq.s32.totalorder %s8, 1
    %p88 = por %p86, %p87
    %p89 = scmp.ne.s32.totalorder %s81, %s84
    %p90 = scmp.eq.s32.totalorder %s8, 0
    %p91 = por %p89, %p90
    %p92 = scmp.ne.s32.totalorder %s81, %s84
    %p93 = scmp.eq.s32.totalorder %s13, 1
    %p94 = por %p92, %p93
    %p95 = scmp.ne.s32.totalorder %s84, %s85
    %p96 = scmp.eq.s32.totalorder %s13, 0
    %p97 = por %p95, %p96
    %p98 = scmp.ne.s32.totalorder %s84, %s85
    %p99 = scmp.eq.s32.totalorder %s14, 1
    %p100 = por %p98, %p99
    %p102 = scmp.ne.s32.totalorder %s85, %s101
    %p103 = scmp.eq.s32.totalorder %s14, 0
    %p104 = por %p102, %p103
    %p105 = scmp.le.s32.totalorder 1, %s8
    %p106 = scmp.lt.s32.totalorder %s8, 3
    %p107 = pnand %p105, %p106
    %p108 = pneg %p107
    // Predicated region
    $region9: #{_lambda_.3} parent=5 // pred_check
      _
    $region10: #{_lambda_.3} parent=5 // pred_check_branch
      %110 = sbr.rel (%p107) target = $region12
    $region11: #{_lambda_.3} parent=5 // pred_region
      %s111 = ssub.s32 %s8, 1
      // Predicated region
      $region13: #{_lambda_.3} parent=11 // pred_check
        %p112 = pneg %p69
      $region14: #{_lambda_.3} parent=11 // pred_check_branch
        %114 = sbr.rel (%p112) target = $region16
      $region15: #{_lambda_.3} parent=11 // pred_region
        _
      $region16: #{_lambda_.3} parent=11 // pred_fallthru
        _
    $region12: #{_lambda_.3} parent=5 // pred_fallthru
      _
    %p115 = scmp.lt.s32.totalorder %s8, 2
    // Predicated region
    $region17: #{_lambda_.3} parent=5 // pred_check
      %p116 = pneg %p115
    $region18: #{_lambda_.3} parent=5 // pred_check_branch
      %118 = sbr.rel (%p116) target = $region20
    $region19: #{_lambda_.3} parent=5 // pred_region
      // Predicated region
      $region21: #{_lambda_.3} parent=19 // pred_check
        %p119 = pneg %p42
      $region22: #{_lambda_.3} parent=19 // pred_check_branch
        %121 = sbr.rel (%p119) target = $region24
      $region23: #{_lambda_.3} parent=19 // pred_region
        %p122 = scmp.lt.s32.totalorder %s15, 1
        %s123 = scalar_select %p122, %s15, 1
        %p124 = scmp.lt.s32.totalorder %s16, 0
        %s125 = scalar_select %p124, %s16, 0
        %s126 = smul.addr %s125, 17
        %s127 = smul.addr %s123, 17
        %s128 = sadd.s32 %s126, %s127
        %s129 = smul.addr %s128, 4
        %s130 = scalar_lea.vmem %s0, %s129
      $region24: #{_lambda_.3} parent=19 // pred_fallthru
        _
    $region20: #{_lambda_.3} parent=5 // pred_fallthru
      _
    %p131 = scmp.le.s32.totalorder 1, %s8
    %p132 = scmp.lt.s32.totalorder %s8, 3
    %p133 = pnand %p131, %p132
    %p134 = pneg %p133
    // Predicated region
    $region25: #{_lambda_.3} parent=5 // pred_check
      _
    $region26: #{_lambda_.3} parent=5 // pred_check_branch
      %136 = sbr.rel (%p133) target = $region28
    $region27: #{_lambda_.3} parent=5 // pred_region
      %s137 = ssub.s32 %s8, 1
      %p138 = scmp.lt.s32.totalorder %s17, 1
      %s139 = scalar_select %p138, %s17, 1
      %p140 = scmp.lt.s32.totalorder %s18, 0
      %s141 = scalar_select %p140, %s18, 0
      %s142 = smul.addr %s141, 17
      %s143 = smul.addr %s139, 17
      %s144 = sadd.s32 %s142, %s143
      %s145 = smul.addr %s144, 4
      %s146 = scalar_lea.vmem %s0, %s145
      %p147 = pneg %p48
      %p148 = pneg %p45
      %p149 = pneg %p69
      %p150 = pneg %p66
      %p151 = pneg %p97
      %p152 = pneg %p94
      %p153 = scmp.lt.s32.totalorder %s17, 1
      %s154 = scalar_select %p153, %s17, 1
      %p155 = scmp.lt.s32.totalorder %s18, 0
      %s156 = scalar_select %p155, %s18, 0
      %s157 = smul.addr %s154, 3
      %s158 = sadd.s32 %s156, %s157
      %s159 = smul.addr %s158, 8
      %s160 = scalar_lea.vmem %s2, %s159
      %p161 = scmp.lt.s32.totalorder %s17, 1
      %s162 = scalar_select %p161, %s17, 1
      %p163 = scmp.lt.s32.totalorder %s18, 0
      %s164 = scalar_select %p163, %s18, 0
      %s165 = smul.addr %s164, 17
      %s166 = smul.addr %s162, 17
      %s167 = sadd.s32 %s165, %s166
      %s168 = smul.addr %s167, 4
      %s169 = scalar_lea.vmem %s0, %s168
      %p170 = scmp.lt.s32.totalorder %s17, 1
      %s171 = scalar_select %p170, %s17, 1
      %p172 = scmp.lt.s32.totalorder %s18, 0
      %s173 = scalar_select %p172, %s18, 0
      %s174 = smul.addr %s171, 3
      %s175 = sadd.s32 %s173, %s174
      %s176 = smul.addr %s175, 8
      %s177 = scalar_lea.vmem %s2, %s176
      %v179 = vld [vmem:[%s1] sm:$0xf]
      %v180 = vld [vmem:[%s1 + $0x4] sm:$0xf]
      %v181 = vld [vmem:[%s1 + $0x8] sm:$0xf]
      %v182 = vld [vmem:[%s169] sm:$0xf]
      %v183 = vld [vmem:[%s169 + $0x4] sm:$0xf]
      %v184 = vld [vmem:[%s169 + $0x8] sm:$0xf]
      %v185 = vld [vmem:[%s169 + $0xc] sm:$0xf]
      %v186 = vld [vmem:[%s169 + $0x10] sm:$0xf]
      %v187 = vld [vmem:[%s169 + $0x14] sm:$0xf]
      %v188 = vld [vmem:[%s169 + $0x18] sm:$0xf]
      %v189 = vld [vmem:[%s169 + $0x1c] sm:$0xf]
      %v190 = vld [vmem:[%s169 + $0x20] sm:$0xf]
      %v191 = vld [vmem:[%s169 + $0x24] sm:$0xf]
      %v192 = vld [vmem:[%s169 + $0x28] sm:$0xf]
      %v193 = vld [vmem:[%s169 + $0x2c] sm:$0xf]
      %v194 = vld [vmem:[%s169 + $0x30] sm:$0xf]
      %v195 = vld [vmem:[%s169 + $0x34] sm:$0xf]
      %v196 = vld [vmem:[%s169 + $0x38] sm:$0xf]
      %v197 = vld [vmem:[%s169 + $0x3c] sm:$0xf]
      %v198 = vld [vmem:[%s169 + $0x40] sm:$0x1]
      %v199 = vld [vmem:[%s169] sm:$0xe]
      %v200 = vld [vmem:[%s169 + $0x40] sm:$0x3]
      %v217 = vunpack.c.l.b16 %v182
      %v218 = vunpack.c.l.b16 %v183
      %v219 = vunpack.c.l.b16 %v184
      %v220 = vunpack.c.l.b16 %v185
      %v221 = vunpack.c.l.b16 %v186
      %v222 = vunpack.c.l.b16 %v187
      %v223 = vunpack.c.l.b16 %v188
      %v224 = vunpack.c.l.b16 %v189
      %v225 = vunpack.c.l.b16 %v190
      %v226 = vunpack.c.l.b16 %v191
      %v227 = vunpack.c.l.b16 %v192
      %v228 = vunpack.c.l.b16 %v193
      %v229 = vunpack.c.l.b16 %v194
      %v230 = vunpack.c.l.b16 %v195
      %v231 = vunpack.c.l.b16 %v196
      %v232 = vunpack.c.l.b16 %v197
      %v233 = vpack.c.b16 %v218, %v217
      %v234 = vpack.c.b16 %v220, %v219
      %v235 = vpack.c.b16 %v222, %v221
      %v236 = vpack.c.b16 %v224, %v223
      %v237 = vpack.c.b16 %v226, %v225
      %v238 = vpack.c.b16 %v228, %v227
      %v239 = vpack.c.b16 %v230, %v229
      %v240 = vpack.c.b16 %v232, %v231
      %v242 = vunpack.c.l.b16 %v198
      %v243 = vpack.c.b16 %v242, %v242
      %vm244 = vsmask.f32 7424
      %v246 = vshrl.u32 %v233, 16
      %v248 = vshll.u32 %v233, 16
      %v250 = vrot.slane %v248, 1
      %v251 = vor.u32 %v246, %v250
      %v253 = vshll.u32 %v234, 16
      %v255 = vrot.slane %v253, 1
      %v256 = vsel %vm244, %v251, %v255
      %v257 = vshrl.u32 %v234, 16
      %v259 = vor.u32 %v257, %v255
      %v261 = vshll.u32 %v235, 16
      %v263 = vrot.slane %v261, 1
      %v264 = vsel %vm244, %v259, %v263
      %v265 = vshrl.u32 %v235, 16
      %v267 = vor.u32 %v265, %v263
      %v269 = vshll.u32 %v236, 16
      %v271 = vrot.slane %v269, 1
      %v272 = vsel %vm244, %v267, %v271
      %v273 = vshrl.u32 %v236, 16
      %v275 = vor.u32 %v273, %v271
      %v277 = vshll.u32 %v237, 16
      %v279 = vrot.slane %v277, 1
      %v280 = vsel %vm244, %v275, %v279
      %v281 = vshrl.u32 %v237, 16
      %v283 = vor.u32 %v281, %v279
      %v285 = vshll.u32 %v238, 16
      %v287 = vrot.slane %v285, 1
      %v288 = vsel %vm244, %v283, %v287
      %v289 = vshrl.u32 %v238, 16
      %v291 = vor.u32 %v289, %v287
      %v293 = vshll.u32 %v239, 16
      %v295 = vrot.slane %v293, 1
      %v296 = vsel %vm244, %v291, %v295
      %v297 = vshrl.u32 %v239, 16
      %v299 = vor.u32 %v297, %v295
      %v301 = vshll.u32 %v240, 16
      %v303 = vrot.slane %v301, 1
      %v304 = vsel %vm244, %v299, %v303
      %v305 = vshrl.u32 %v240, 16
      %v307 = vor.u32 %v305, %v303
      %v309 = vshll.u32 %v243, 16
      %v311 = vrot.slane %v309, 1
      %v312 = vsel %vm244, %v307, %v311
      %313 = vrot.lane.b32.xlu0 %v256, 32
      %v314 = vpop.permute.xlu0 %313
      %315 = vrot.lane.b32.xlu0 %v264, 32
      %v316 = vpop.permute.xlu0 %315
      %317 = vrot.lane.b32.xlu0 %v272, 32
      %v318 = vpop.permute.xlu0 %317
      %319 = vrot.lane.b32.xlu0 %v280, 32
      %v320 = vpop.permute.xlu0 %319
      %321 = vrot.lane.b32.xlu0 %v288, 32
      %v322 = vpop.permute.xlu0 %321
      %323 = vrot.lane.b32.xlu0 %v296, 32
      %v324 = vpop.permute.xlu0 %323
      %325 = vrot.lane.b32.xlu0 %v304, 32
      %v326 = vpop.permute.xlu0 %325
      %327 = vrot.lane.b32.xlu0 %v312, 32
      %v328 = vpop.permute.xlu0 %327
      %v330 = vunpack.c.l.b16 %v199
      %v331 = vpack.c.b16 %v218, %v330
      %vm332 = vcmask 1046528
      %v333 = vrot.slane %v331, 1
      %v334 = vrot.slane %v234, 1
      %v335 = vsel %vm332, %v333, %v334
      %v336 = vrot.slane %v235, 1
      %v337 = vsel %vm332, %v334, %v336
      %v338 = vrot.slane %v236, 1
      %v339 = vsel %vm332, %v336, %v338
      %v340 = vrot.slane %v237, 1
      %v341 = vsel %vm332, %v338, %v340
      %v342 = vrot.slane %v238, 1
      %v343 = vsel %vm332, %v340, %v342
      %v344 = vrot.slane %v239, 1
      %v345 = vsel %vm332, %v342, %v344
      %v346 = vrot.slane %v240, 1
      %v347 = vsel %vm332, %v344, %v346
      %v348 = vrot.slane %v243, 1
      %v349 = vsel %vm332, %v346, %v348
      %350 = vrot.lane.b32.xlu0 %v335, 64
      %v351 = vpop.permute.xlu0 %350
      %352 = vrot.lane.b32.xlu0 %v337, 64
      %v353 = vpop.permute.xlu0 %352
      %354 = vrot.lane.b32.xlu0 %v339, 64
      %v355 = vpop.permute.xlu0 %354
      %356 = vrot.lane.b32.xlu0 %v341, 64
      %v357 = vpop.permute.xlu0 %356
      %358 = vrot.lane.b32.xlu0 %v343, 64
      %v359 = vpop.permute.xlu0 %358
      %360 = vrot.lane.b32.xlu0 %v345, 64
      %v361 = vpop.permute.xlu0 %360
      %362 = vrot.lane.b32.xlu0 %v347, 64
      %v363 = vpop.permute.xlu0 %362
      %364 = vrot.lane.b32.xlu0 %v349, 64
      %v365 = vpop.permute.xlu0 %364
      %v367 = vunpack.c.l.b16 %v200
      %v368 = vpack.c.b16 %v367, %v367
      %vm369 = vsmask.f32 6400
      %v371 = vshrl.u32 %v331, 16
      %v373 = vrot.slane %v371, 1
      %v374 = vshll.u32 %v331, 16
      %v376 = vrot.slane %v374, 2
      %v377 = vor.u32 %v373, %v376
      %v378 = vrot.slane %v257, 1
      %v379 = vrot.slane %v253, 2
      %v380 = vor.u32 %v378, %v379
      %v381 = vsel %vm369, %v377, %v380
      %v382 = vrot.slane %v265, 1
      %v383 = vrot.slane %v261, 2
      %v384 = vor.u32 %v382, %v383
      %v385 = vsel %vm369, %v380, %v384
      %v386 = vrot.slane %v273, 1
      %v387 = vrot.slane %v269, 2
      %v388 = vor.u32 %v386, %v387
      %v389 = vsel %vm369, %v384, %v388
      %v390 = vrot.slane %v281, 1
      %v391 = vrot.slane %v277, 2
      %v392 = vor.u32 %v390, %v391
      %v393 = vsel %vm369, %v388, %v392
      %v394 = vrot.slane %v289, 1
      %v395 = vrot.slane %v285, 2
      %v396 = vor.u32 %v394, %v395
      %v397 = vsel %vm369, %v392, %v396
      %v398 = vrot.slane %v297, 1
      %v399 = vrot.slane %v293, 2
      %v400 = vor.u32 %v398, %v399
      %v401 = vsel %vm369, %v396, %v400
      %v402 = vrot.slane %v305, 1
      %v403 = vrot.slane %v301, 2
      %v404 = vor.u32 %v402, %v403
      %v405 = vsel %vm369, %v400, %v404
      %v407 = vshrl.u32 %v368, 16
      %v409 = vrot.slane %v407, 1
      %v410 = vshll.u32 %v368, 16
      %v412 = vrot.slane %v410, 2
      %v413 = vor.u32 %v409, %v412
      %v414 = vsel %vm369, %v404, %v413
      %415 = vrot.lane.b32.xlu0 %v381, 96
      %v416 = vpop.permute.xlu0 %415
      %417 = vrot.lane.b32.xlu0 %v385, 96
      %v418 = vpop.permute.xlu0 %417
      %419 = vrot.lane.b32.xlu0 %v389, 96
      %v420 = vpop.permute.xlu0 %419
      %421 = vrot.lane.b32.xlu0 %v393, 96
      %v422 = vpop.permute.xlu0 %421
      %423 = vrot.lane.b32.xlu0 %v397, 96
      %v424 = vpop.permute.xlu0 %423
      %425 = vrot.lane.b32.xlu0 %v401, 96
      %v426 = vpop.permute.xlu0 %425
      %427 = vrot.lane.b32.xlu0 %v405, 96
      %v428 = vpop.permute.xlu0 %427
      %429 = vrot.lane.b32.xlu0 %v414, 96
      %v430 = vpop.permute.xlu0 %429
      %vm431 = vcmask 261120
      %v433 = vsel %vm431, %v233, %v314
      %v435 = vsel %vm431, %v234, %v316
      %v437 = vsel %vm431, %v235, %v318
      %v439 = vsel %vm431, %v236, %v320
      %v441 = vsel %vm431, %v237, %v322
      %v443 = vsel %vm431, %v238, %v324
      %v445 = vsel %vm431, %v239, %v326
      %v447 = vsel %vm431, %v240, %v328
      %vm448 = vcmask 523264
      %v450 = vsel %vm448, %v433, %v351
      %v452 = vsel %vm448, %v435, %v353
      %v454 = vsel %vm448, %v437, %v355
      %v456 = vsel %vm448, %v439, %v357
      %v458 = vsel %vm448, %v441, %v359
      %v460 = vsel %vm448, %v443, %v361
      %v462 = vsel %vm448, %v445, %v363
      %v464 = vsel %vm448, %v447, %v365
      %vm465 = vcmask 785408
      %v467 = vsel %vm465, %v450, %v416
      %v470 = vsel %vm465, %v452, %v418
      %v473 = vsel %vm465, %v454, %v420
      %v476 = vsel %vm465, %v456, %v422
      %v479 = vsel %vm465, %v458, %v424
      %v482 = vsel %vm465, %v460, %v426
      %v485 = vsel %vm465, %v462, %v428
      %v488 = vsel %vm465, %v464, %v430
      %v493 = vunpack.c.l.b16 %v179
      %v494 = vunpack.c.l.b16 %v180
      %v495 = vunpack.c.l.b16 %v181
      %v496 = vpack.c.b16 %v494, %v493
      %v497 = vpack.c.b16 %v495, %v495
      %500 = vmatprep.subr.bf16.mxu0 0
      %501 = vmatpush1.bf16.xpose.msra.mxu0 %v467
      %502 = vmatprep.subr.bf16.mxu0 0
      %503 = vmatpush1.bf16.xpose.msra.mxu0 %v470
      %504 = vmatprep.subr.bf16.mxu0 0
      %505 = vmatpush1.bf16.xpose.msra.mxu0 %v473
      %506 = vmatprep.subr.bf16.mxu0 0
      %507 = vmatpush1.bf16.xpose.msra.mxu0 %v476
      %508 = vmatprep.subr.bf16.mxu0 0
      %509 = vmatpush1.bf16.xpose.msra.mxu0 %v479
      %510 = vmatprep.subr.bf16.mxu0 0
      %511 = vmatpush1.bf16.xpose.msra.mxu0 %v482
      %512 = vmatprep.subr.bf16.mxu0 0
      %513 = vmatpush1.bf16.xpose.msra.mxu0 %v485
      %514 = vmatprep.subr.bf16.mxu0 0
      %515 = vmatpush1.bf16.xpose.msra.mxu0 %v488
      %516 = vmatprep.subr.bf16.mxu0 0
      %517 = vmatpush1.bf16.xpose.msra.mxu0 0
      %518 = vmatprep.subr.bf16.mxu0 0
      %519 = vmatpush1.bf16.xpose.msra.mxu0 0
      %520 = vmatprep.subr.bf16.mxu0 0
      %521 = vmatpush1.bf16.xpose.msra.mxu0 0
      %522 = vmatprep.subr.bf16.mxu0 0
      %523 = vmatpush1.bf16.xpose.msra.mxu0 0
      %524 = vmatprep.subr.bf16.mxu0 0
      %525 = vmatpush1.bf16.xpose.msra.mxu0 0
      %526 = vmatprep.subr.bf16.mxu0 0
      %527 = vmatpush1.bf16.xpose.msra.mxu0 0
      %528 = vmatprep.subr.bf16.mxu0 0
      %529 = vmatpush1.bf16.xpose.msra.mxu0 0
      %530 = vmatprep.subr.bf16.mxu0 0
      %531 = vmatpush1.bf16.xpose.msra.mxu0 0
      %532 = vmatprep.mubr.bf16.mxu0 0
      %533 = vmatmul.mubr.bf16.gmra.mrb[0].mxu0 %v496
      %v534 = vpop.f32.mrb[0].mxu0
      %v535 = vadd.f32 0.0, %v534
      %v536 = vpop.f32.mrb[0].mxu0
      %v537 = vpop.f32.mrb[0].mxu0
      %v538 = vadd.f32 0.0, %v537
      %v539 = vpop.f32.mrb[0].mxu0
      %540 = vmatprep.mubr.bf16.mxu0 0
      %541 = vmatmul.mubr.bf16.gmra.mrb[0].mxu0 %v497
      %v542 = vpop.f32.mrb[0].mxu0
      %v543 = vadd.f32 0.0, %v542
      %v544 = vpop.f32.mrb[0].mxu0
      %v545 = vpop.f32.mrb[0].mxu0
      %v546 = vpop.f32.mrb[0].mxu0
      %547 = vdwg.mxu0
      %548 = vst [vmem:[%s177] sm:$0xff] %v535
      %549 = vst [vmem:[%s177 + $0x8] sm:$0xff] %v538
      %550 = vst [vmem:[%s177 + $0x10] sm:$0xff] %v543
      %p551 = scmp.lt.s32.totalorder %s17, 1
      %s552 = scalar_select %p551, %s17, 1
      %p553 = scmp.lt.s32.totalorder %s18, 0
      %s554 = scalar_select %p553, %s18, 0
      %s555 = smul.addr %s552, 3
      %s556 = sadd.s32 %s554, %s555
      %s557 = smul.addr %s556, 8
      %s558 = scalar_lea.vmem %s2, %s557
      // Predicated region
      $region29: #{_lambda_.3} parent=27 // pred_check
        %p559 = pneg %p94
      $region30: #{_lambda_.3} parent=27 // pred_check_branch
        %561 = sbr.rel (%p559) target = $region32
      $region31: #{_lambda_.3} parent=27 // pred_region
        _
      $region32: #{_lambda_.3} parent=27 // pred_fallthru
        _
    $region28: #{_lambda_.3} parent=5 // pred_fallthru
      _
    %p562 = scmp.le.s32.totalorder 2, %s8
    // Predicated region
    $region33: #{_lambda_.3} parent=5 // pred_check
      %p563 = pneg %p562
    $region34: #{_lambda_.3} parent=5 // pred_check_branch
      %565 = sbr.rel (%p563) target = $region36
    $region35: #{_lambda_.3} parent=5 // pred_region
      %s566 = ssub.s32 %s8, 2
      // Predicated region
      $region37: #{_lambda_.3} parent=35 // pred_check
        %p567 = pneg %p100
      $region38: #{_lambda_.3} parent=35 // pred_check_branch
        %569 = sbr.rel (%p567) target = $region40
      $region39: #{_lambda_.3} parent=35 // pred_region
        %p570 = scmp.lt.s32.totalorder %s19, 1
        %s571 = scalar_select %p570, %s19, 1
        %p572 = scmp.lt.s32.totalorder %s20, 0
        %s573 = scalar_select %p572, %s20, 0
        %s574 = smul.addr %s571, 3
        %s575 = sadd.s32 %s573, %s574
        %s576 = smul.addr %s575, 8
        %s577 = scalar_lea.vmem %s2, %s576
      $region40: #{_lambda_.3} parent=35 // pred_fallthru
        _
    $region36: #{_lambda_.3} parent=5 // pred_fallthru
      _
  $region6: #{_lambda_.3} parent=0 // loop_footer
    %s12 = sadd.s32 1, %s8
  $region7: #{_lambda_.3} parent=0 // loop_footer_branch
    %7 = sbr.rel target = $region3
  $region8: #{_lambda_.3} parent=0 // loop_exit
    _

</llo_original>
